<compile_context>
chip_gen: v6e
topology: v6e:2x2x1
jax: 0.10.0
libtpu: 0.0.40
codegen_flags: <defaults>
</compile_context>

<pallas_src>
import functools

import jax
import jax.numpy as jnp
from jax.experimental import pallas as pl
from jax.experimental.pallas import tpu as pltpu


# ----------------------------------------------------------------------------
# Kernel
# ----------------------------------------------------------------------------
def _moe_ffn_kernel(active_ref, x_ref, scale_ref, wg_ref, wu_ref, wd_ref,
                    o_ref, acc_ref, *, n_total):
    i = pl.program_id(0)   # row tile            ("parallel")
    e = pl.program_id(1)   # expert              ("arbitrary", accumulated)
    t = pl.program_id(2)   # intermediate tile   ("arbitrary", accumulated)

    @pl.when((e == 0) & (t == 0))
    def _init():
        acc_ref[...] = jnp.zeros_like(acc_ref)

    # Skip the whole expert when no token in this row tile routed to it.
    # active_ref is an SMEM scalar-prefetch array -> cheap scalar branch.
    @pl.when(active_ref[i * n_total + e] > 0)
    def _expert():
        x = x_ref[...]                       # native dtype -> MXU fast path for bf16
        wg = wg_ref[0]                       # (H, tI)  no f32 up-casts
        wu = wu_ref[0]                       # (H, tI)
        wd = wd_ref[0]                       # (tI, H)
        z = jnp.dot(x, wg, preferred_element_type=jnp.float32)
        u = jnp.dot(x, wu, preferred_element_type=jnp.float32)
        # SiLU: the reciprocal goes to the EUP slot (approx) instead of the VALU.
        h = z * pl.reciprocal(1.0 + jnp.exp(-z), approx=True) * u
        y = jnp.dot(h.astype(wd_ref.dtype), wd, preferred_element_type=jnp.float32)

        # Per-token routing weight for expert e (shared experts carry 1.0).
        s = scale_ref[...]                                        # (T, n_total) f32
        col = jax.lax.broadcasted_iota(jnp.int32, s.shape, 1)
        w = jnp.sum(jnp.where(col == e, s, 0.0), axis=-1, keepdims=True)
        acc_ref[...] += w * y

    @pl.when((e == pl.num_programs(1) - 1) & (t == pl.num_programs(2) - 1))
    def _finalize():
        o_ref[...] = acc_ref[...].astype(o_ref.dtype)


# ----------------------------------------------------------------------------
# Tiling / hardware helpers
# ----------------------------------------------------------------------------
def _vmem_capacity_bytes(default=64 << 20):
    try:
        info = pltpu.get_tpu_info()
    except Exception:
        return default
    for name in ("vmem_capacity_bytes", "vmem_size_bytes", "vmem_bytes"):
        v = getattr(info, name, None)
        if isinstance(v, int) and v > 0:
            return int(v)
    return default


def _num_tensorcores():
    # Megacore chips (2 TensorCores per device): v7x / v4 / v5p.
    try:
        kind = jax.devices()[0].device_kind.lower().replace(" ", "")
    except Exception:
        return 1
    if any(tag in kind for tag in ("v7", "tpu7", "v4", "v5p")):
        return 2
    return 1


def _choose_tiling(n_rows, H, I, n_total, x_itemsize, w_itemsize, vmem_cap,
                   rows_cap=1024, tile_i_cap=None, num_tc=1):
    rows_cap = max(8, (rows_cap // 8) * 8)
    budget = max(16 << 20, min(int(0.80 * vmem_cap), vmem_cap - (8 << 20)))

    def w_bytes(ti):                     # Wg + Wu + Wd blocks, double-buffered
        return 2 * 3 * H * ti * w_itemsize

    # Intermediate-dim tile: largest lane-aligned (mult. of 128) divisor of I
    # whose double-buffered weight blocks fit in half the budget.
    if I % 128 == 0:
        cands = [d * 128 for d in range(I // 128, 0, -1) if (I // 128) % d == 0]
    else:
        cands = [I]                      # must take the full dim (layout constraint)
    if tile_i_cap is not None:
        capped = [c for c in cands if c <= tile_i_cap]
        cands = capped if capped else [cands[-1]]
    tile_i = cands[-1]
    for ti in cands:
        if w_bytes(ti) <= budget // 2:
            tile_i = ti
            break

    lanes = ((n_total + 127) // 128) * 128
    per_row = (2 * H * x_itemsize        # x block (double-buffered)
               + 2 * H * x_itemsize      # out block (double-buffered)
               + 2 * lanes * 4           # routing-scale block (f32)
               + H * 4)                  # f32 accumulator scratch
    avail = max(budget - w_bytes(tile_i), 8 * per_row)
    tile_rows = max(8, min(rows_cap, (avail // per_row) // 8 * 8))
    tile_rows = min(tile_rows, ((n_rows + 7) // 8) * 8)        # don't exceed the data
    if num_tc > 1 and n_rows >= 16:                            # keep both TCs busy
        tile_rows = min(tile_rows, ((-(-n_rows // 2)) + 7) // 8 * 8)
    return int(tile_rows), int(tile_i)


# ----------------------------------------------------------------------------
# Wrapper (full MOEFeedForward.forward, eval path)
# ----------------------------------------------------------------------------
def moe_feedforward(x, gate_weight, w_gate, w_up, w_down, *, top_k,
                    norm_topk_prob=True, rows_cap=1024, tile_i_cap=None):
    """x: (B,S,H); gate_weight: (n_routed,H); w_gate/w_up: (E_total,H,I);
    w_down: (E_total,I,H). Experts are stacked routed-first, then shared; weights
    are pre-transposed so the kernel computes plain x @ W."""
    B, S, H = x.shape
    n_routed = gate_weight.shape[0]
    n_total, _, I = w_gate.shape
    n_shared = n_total - n_routed

    x2 = x.reshape(-1, H)
    n_rows = x2.shape[0]

    # ---- router (tiny n_rows x n_routed GEMM) in f32, matching MoEGate ----
    logits = jnp.dot(x2.astype(jnp.float32), gate_weight.T.astype(jnp.float32))
    scores = jax.nn.softmax(logits, axis=-1)
    topw, topi = jax.lax.top_k(scores, top_k)
    if norm_topk_prob and top_k > 1:
        topw = topw / (jnp.sum(topw, axis=-1, keepdims=True) + 1e-20)
    rows = jnp.arange(n_rows)[:, None]
    gates = jnp.zeros_like(scores).at[rows, topi].set(topw)           # (n_rows, n_routed)
    scale = jnp.concatenate(
        [gates, jnp.ones((n_rows, n_shared), jnp.float32)], axis=1)   # shared -> 1.0

    # ---- per-chip tiling / VMEM budget ----
    vmem_cap = _vmem_capacity_bytes()
    xb = jnp.dtype(x.dtype).itemsize
    wb = jnp.dtype(w_gate.dtype).itemsize
    tile_rows, tile_i = _choose_tiling(
        n_rows, H, I, n_total, xb, wb, vmem_cap,
        rows_cap=rows_cap, tile_i_cap=tile_i_cap, num_tc=_num_tensorcores())

    n_padded = -(-n_rows // tile_rows) * tile_rows
    if n_padded != n_rows:          # zero rows -> zero output (no bias), sliced off
        x2 = jnp.pad(x2, ((0, n_padded - n_rows), (0, 0)))
        scale = jnp.pad(scale, ((0, n_padded - n_rows), (0, 0)))
    num_tiles = n_padded // tile_rows

    # per-(row tile, expert) activity mask -> SMEM scalar prefetch (flat 1D)
    active = jnp.any(
        scale.reshape(num_tiles, tile_rows, n_total) > 0.0, axis=1
    ).astype(jnp.int32).reshape(-1)

    lane = lambda n: ((n + 127) // 128) * 128
    est = (2 * tile_rows * H * xb                 # x blocks (double-buffered)
           + 2 * tile_rows * lane(n_total) * 4    # routing-scale blocks
           + 2 * 3 * H * tile_i * wb              # Wg/Wu/Wd blocks (double-buffered)
           + 2 * tile_rows * H * xb               # out blocks
           + tile_rows * H * 4)                   # f32 accumulator scratch
    headroom = max(16 << 20, min(int(0.85 * vmem_cap), vmem_cap - (8 << 20)))
    vmem_limit = int(min(headroom, max(est + (4 << 20), 16 << 20)))

    kernel = functools.partial(_moe_ffn_kernel, n_total=n_total)

    out = pl.pallas_call(
        kernel,
        out_shape=jax.ShapeDtypeStruct((n_padded, H), x.dtype),
        grid_spec=pltpu.PrefetchScalarGridSpec(
            num_scalar_prefetch=1,
            grid=(num_tiles, n_total, I // tile_i),
            in_specs=[
                pl.BlockSpec((tile_rows, H), lambda i, e, t, a: (i, 0)),        # x
                pl.BlockSpec((tile_rows, n_total), lambda i, e, t, a: (i, 0)),  # gates
                pl.BlockSpec((1, H, tile_i), lambda i, e, t, a: (e, 0, t)),     # Wg
                pl.BlockSpec((1, H, tile_i), lambda i, e, t, a: (e, 0, t)),     # Wu
                pl.BlockSpec((1, tile_i, H), lambda i, e, t, a: (e, t, 0)),     # Wd
            ],
            out_specs=pl.BlockSpec((tile_rows, H), lambda i, e, t, a: (i, 0)),
            scratch_shapes=[pltpu.VMEM((tile_rows, H), jnp.float32)],
        ),
        compiler_params=pltpu.CompilerParams(
            dimension_semantics=("parallel", "arbitrary", "arbitrary"),
            vmem_limit_bytes=vmem_limit,
        ),
    )(active, x2, scale, w_gate, w_up, w_down)

    if n_padded != n_rows:
        out = out[:n_rows]
    return out.reshape(B, S, H)


# ----------------------------------------------------------------------------
# Pure-JAX reference (mirrors the PyTorch module, f32 math)
# ----------------------------------------------------------------------------
def _reference(x, gate_weight, w_gate, w_up, w_down, *, top_k, n_routed,
               norm_topk_prob=True):
    B, S, H = x.shape
    xf = x.reshape(-1, H).astype(jnp.float32)
    logits = xf @ gate_weight.T.astype(jnp.float32)
    scores = jax.nn.softmax(logits, axis=-1)
    topw, topi = jax.lax.top_k(scores, top_k)
    if norm_topk_prob and top_k > 1:
        topw = topw / (jnp.sum(topw, axis=-1, keepdims=True) + 1e-20)
    rows = jnp.arange(xf.shape[0])[:, None]
    dense = jnp.zeros_like(scores).at[rows, topi].set(topw)

    def ffn(g, u, d):
        z = xf @ g.astype(jnp.float32)
        return (jax.nn.silu(z) * (xf @ u.astype(jnp.float32))) @ d.astype(jnp.float32)

    out = jnp.zeros_like(xf)
    n_total = w_gate.shape[0]
    for e in range(n_routed):
        out = out + dense[:, e:e + 1] * ffn(w_gate[e], w_up[e], w_down[e])
    for e in range(n_routed, n_total):          # shared experts, weight 1.0
        out = out + ffn(w_gate[e], w_up[e], w_down[e])
    return out.reshape(B, S, H)


if __name__ == "__main__":
    key = jax.random.PRNGKey(0)
    batch, seq, hidden = 2, 8, 128
    # MiniMindConfig: intermediate_size = 64 * ceil(hidden * 8/3 / 64) -> 384
    intermediate = 64 * ((int(hidden * 8 / 3) + 63) // 64)
    n_routed, n_shared, top_k = 4, 1, 2
    n_total = n_routed + n_shared

    ks = jax.random.split(key, 5)
    x = jax.random.normal(ks[0], (batch, seq, hidden), dtype=jnp.float32)
    gate_weight = jax.random.normal(ks[1], (n_routed, hidden), dtype=jnp.float32) * 0.1
    w_gate = jax.random.normal(ks[2], (n_total, hidden, intermediate), dtype=jnp.float32) * 0.05
    w_up = jax.random.normal(ks[3], (n_total, hidden, intermediate), dtype=jnp.float32) * 0.05
    w_down = jax.random.normal(ks[4], (n_total, intermediate, hidden), dtype=jnp.float32) * 0.05

    # 1) f32 run with small tiles forced so the multi-row-tile and I-tiling
    #    (accumulation) paths are exercised.
    y = moe_feedforward(x, gate_weight, w_gate, w_up, w_down, top_k=top_k,
                        norm_topk_prob=True, rows_cap=8, tile_i_cap=128)
    y = jax.block_until_ready(y)
    ref = _reference(x, gate_weight, w_gate, w_up, w_down,
                     top_k=top_k, n_routed=n_routed)
    assert y.shape == x.shape
    err = float(jnp.max(jnp.abs(y.astype(jnp.float32) - ref)))
    assert err < 5e-3, f"f32 path mismatch vs reference, max abs diff = {err}"

    # 2) bf16 run with default (large-tile) settings — native-dtype MXU fast path.
    xb = x.astype(jnp.bfloat16)
    gb = gate_weight.astype(jnp.bfloat16)
    wgb, wub, wdb = (w_gate.astype(jnp.bfloat16), w_up.astype(jnp.bfloat16),
                     w_down.astype(jnp.bfloat16))
    yb = moe_feedforward(xb, gb, wgb, wub, wdb, top_k=top_k, norm_topk_prob=True)
    yb = jax.block_until_ready(yb)
    refb = _reference(xb, gb, wgb, wub, wdb, top_k=top_k, n_routed=n_routed)
    errb = float(jnp.max(jnp.abs(yb.astype(jnp.float32) - refb)))
    assert errb < 3e-2, f"bf16 path mismatch vs reference, max abs diff = {errb}"

    print("KERNEL_OK")
</pallas_src>

<mosaic_0001>
module attributes {stable_mosaic.version = 11 : i64} {
  func.func @_moe_ffn_kernel(%arg0: i32, %arg1: i32, %arg2: i32, %arg3: memref<10xi32, #tpu.memory_space<smem>>, %arg4: memref<8x128xf32, #tpu.memory_space<vmem>>, %arg5: memref<8x5xf32, #tpu.memory_space<vmem>>, %arg6: memref<1x128x128xf32, #tpu.memory_space<vmem>>, %arg7: memref<1x128x128xf32, #tpu.memory_space<vmem>>, %arg8: memref<1x128x128xf32, #tpu.memory_space<vmem>>, %arg9: memref<8x128xf32, #tpu.memory_space<vmem>>, %arg10: memref<8x128xf32, #tpu.memory_space<vmem>>) attributes {dimension_semantics = [#tpu.dimension_semantics<parallel>, #tpu.dimension_semantics<arbitrary>, #tpu.dimension_semantics<arbitrary>], iteration_bounds = array<i64: 2, 5, 3>, scalar_prefetch = 1 : i64, scratch_operands = 1 : i64, tpu.core_type = #tpu.core_type<tc>, window_params = [{transform_indices = @transform_0, window_bounds = array<i64: 8, 128>}, {transform_indices = @transform_1, window_bounds = array<i64: 8, 5>}, {transform_indices = @transform_2, window_bounds = array<i64: 1, 128, 128>}, {transform_indices = @transform_3, window_bounds = array<i64: 1, 128, 128>}, {transform_indices = @transform_4, window_bounds = array<i64: 1, 128, 128>}, {transform_indices = @transform_5, window_bounds = array<i64: 8, 128>}]} {
    %c0_i32 = arith.constant 0 : i32
    %0 = arith.cmpi eq, %arg1, %c0_i32 : i32
    %c0_i32_0 = arith.constant 0 : i32
    %1 = arith.cmpi eq, %arg2, %c0_i32_0 : i32
    %2 = arith.andi %0, %1 : i1
    %3 = arith.extui %2 : i1 to i32
    %c0_i32_1 = arith.constant 0 : i32
    %4 = arith.cmpi ne, %3, %c0_i32_1 : i32
    scf.if %4 {
      %cst = arith.constant 0.000000e+00 : f32
      %17 = vector.broadcast %cst : f32 to vector<8x128xf32>
      %c0 = arith.constant 0 : index
      %c0_5 = arith.constant 0 : index
      %18 = vector.load %arg10[%c0, %c0_5] : memref<8x128xf32, #tpu.memory_space<vmem>>, vector<8x128xf32>
      tpu.vector_store %arg10[%c0, %c0_5], %17 {strides = array<i32>} : memref<8x128xf32, #tpu.memory_space<vmem>>, vector<8x128xf32>,
    } else {
    }
    %c5_i32 = arith.constant 5 : i32
    %5 = arith.muli %arg0, %c5_i32 : i32
    %6 = arith.addi %5, %arg1 : i32
    %7 = arith.index_cast %6 : i32 to index
    %8 = memref.load %arg3[%7] : memref<10xi32, #tpu.memory_space<smem>>
    %c0_i32_2 = arith.constant 0 : i32
    %9 = arith.cmpi sgt, %8, %c0_i32_2 : i32
    %10 = arith.extui %9 : i1 to i32
    %c0_i32_3 = arith.constant 0 : i32
    %11 = arith.cmpi ne, %10, %c0_i32_3 : i32
    scf.if %11 {
      %c0 = arith.constant 0 : index
      %c0_5 = arith.constant 0 : index
      %17 = vector.load %arg4[%c0, %c0_5] : memref<8x128xf32, #tpu.memory_space<vmem>>, vector<8x128xf32>
      %c0_6 = arith.constant 0 : index
      %c0_7 = arith.constant 0 : index
      %c0_8 = arith.constant 0 : index
      %18 = vector.load %arg6[%c0_6, %c0_7, %c0_8] : memref<1x128x128xf32, #tpu.memory_space<vmem>>, vector<1x128x128xf32>
      %19 = vector.shape_cast %18 : vector<1x128x128xf32> to vector<128x128xf32>
      %c0_9 = arith.constant 0 : index
      %c0_10 = arith.constant 0 : index
      %c0_11 = arith.constant 0 : index
      %20 = vector.load %arg7[%c0_9, %c0_10, %c0_11] : memref<1x128x128xf32, #tpu.memory_space<vmem>>, vector<1x128x128xf32>
      %21 = vector.shape_cast %20 : vector<1x128x128xf32> to vector<128x128xf32>
      %c0_12 = arith.constant 0 : index
      %c0_13 = arith.constant 0 : index
      %c0_14 = arith.constant 0 : index
      %22 = vector.load %arg8[%c0_12, %c0_13, %c0_14] : memref<1x128x128xf32, #tpu.memory_space<vmem>>, vector<1x128x128xf32>
      %23 = vector.shape_cast %22 : vector<1x128x128xf32> to vector<128x128xf32>
      %cst = arith.constant dense<0.000000e+00> : vector<8x128xf32>
      %24 = tpu.matmul %17, %19, %cst {dimension_numbers = #tpu.dot_dimension_numbers<[1], [0], [0], [1], [0, 0, 1, 1], [], []>} : vector<8x128xf32>, vector<128x128xf32>, vector<8x128xf32> -> vector<8x128xf32>
      %cst_15 = arith.constant dense<0.000000e+00> : vector<8x128xf32>
      %25 = tpu.matmul %17, %21, %cst_15 {dimension_numbers = #tpu.dot_dimension_numbers<[1], [0], [0], [1], [0, 0, 1, 1], [], []>} : vector<8x128xf32>, vector<128x128xf32>, vector<8x128xf32> -> vector<8x128xf32>
      %cst_16 = arith.constant 0.000000e+00 : f32
      %26 = vector.broadcast %cst_16 : f32 to vector<8x128xf32>
      %27 = arith.subf %26, %24 : vector<8x128xf32>
      %28 = math.exp %27 : vector<8x128xf32>
      %cst_17 = arith.constant 1.000000e+00 : f32
      %29 = vector.broadcast %cst_17 : f32 to vector<8x128xf32>
      %30 = arith.addf %29, %28 : vector<8x128xf32>
      %31 = tpu.reciprocal %30 {approx = true} : vector<8x128xf32> -> vector<8x128xf32>
      %32 = arith.mulf %24, %31 : vector<8x128xf32>
      %33 = arith.mulf %32, %25 : vector<8x128xf32>
      %cst_18 = arith.constant dense<0.000000e+00> : vector<8x128xf32>
      %34 = tpu.matmul %33, %23, %cst_18 {dimension_numbers = #tpu.dot_dimension_numbers<[1], [0], [0], [1], [0, 0, 1, 1], [], []>} : vector<8x128xf32>, vector<128x128xf32>, vector<8x128xf32> -> vector<8x128xf32>
      %c0_19 = arith.constant 0 : index
      %c0_20 = arith.constant 0 : index
      %35 = vector.load %arg5[%c0_19, %c0_20] : memref<8x5xf32, #tpu.memory_space<vmem>>, vector<8x5xf32>
      %36 = tpu.iota {dimensions = array<i32: 1>} : vector<8x5xi32>
      %37 = vector.broadcast %arg1 : i32 to vector<8x5xi32>
      %38 = arith.cmpi eq, %36, %37 : vector<8x5xi32>
      %cst_21 = arith.constant 0.000000e+00 : f32
      %39 = vector.broadcast %cst_21 : f32 to vector<8x5xf32>
      %40 = arith.select %38, %35, %39 : vector<8x5xi1>, vector<8x5xf32>
      %cst_22 = arith.constant dense<0.000000e+00> : vector<8xf32>
      %41 = vector.multi_reduction <add>, %40, %cst_22 [1] : vector<8x5xf32> to vector<8xf32>
      %42 = vector.shape_cast %41 : vector<8xf32> to vector<8x1xf32>
      %c0_23 = arith.constant 0 : index
      %c0_24 = arith.constant 0 : index
      %43 = vector.load %arg10[%c0_23, %c0_24] : memref<8x128xf32, #tpu.memory_space<vmem>>, vector<8x128xf32>
      %44 = vector.broadcast %42 : vector<8x1xf32> to vector<8x128xf32>
      %45 = arith.mulf %44, %34 : vector<8x128xf32>
      %46 = arith.addf %43, %45 : vector<8x128xf32>
      %c0_25 = arith.constant 0 : index
      %c0_26 = arith.constant 0 : index
      %47 = vector.load %arg10[%c0_25, %c0_26] : memref<8x128xf32, #tpu.memory_space<vmem>>, vector<8x128xf32>
      tpu.vector_store %arg10[%c0_25, %c0_26], %46 {strides = array<i32>} : memref<8x128xf32, #tpu.memory_space<vmem>>, vector<8x128xf32>,
    } else {
    }
    %c4_i32 = arith.constant 4 : i32
    %12 = arith.cmpi eq, %arg1, %c4_i32 : i32
    %c2_i32 = arith.constant 2 : i32
    %13 = arith.cmpi eq, %arg2, %c2_i32 : i32
    %14 = arith.andi %12, %13 : i1
    %15 = arith.extui %14 : i1 to i32
    %c0_i32_4 = arith.constant 0 : i32
    %16 = arith.cmpi ne, %15, %c0_i32_4 : i32
    scf.if %16 {
      %c0 = arith.constant 0 : index
      %c0_5 = arith.constant 0 : index
      %17 = vector.load %arg10[%c0, %c0_5] : memref<8x128xf32, #tpu.memory_space<vmem>>, vector<8x128xf32>
      %c0_6 = arith.constant 0 : index
      %c0_7 = arith.constant 0 : index
      %18 = vector.load %arg9[%c0_6, %c0_7] : memref<8x128xf32, #tpu.memory_space<vmem>>, vector<8x128xf32>
      tpu.vector_store %arg9[%c0_6, %c0_7], %17 {strides = array<i32>} : memref<8x128xf32, #tpu.memory_space<vmem>>, vector<8x128xf32>,
    } else {
    }
    return
  }
  func.func @transform_0(%arg0: i32, %arg1: i32, %arg2: i32, %arg3: memref<10xi32, #tpu.memory_space<smem>>) -> (i32, i32) {
    %c0_i32 = arith.constant 0 : i32
    %c0_i32_0 = arith.constant 0 : i32
    return %arg0, %c0_i32 : i32, i32
  }
  func.func @transform_1(%arg0: i32, %arg1: i32, %arg2: i32, %arg3: memref<10xi32, #tpu.memory_space<smem>>) -> (i32, i32) {
    %c0_i32 = arith.constant 0 : i32
    %c0_i32_0 = arith.constant 0 : i32
    return %arg0, %c0_i32 : i32, i32
  }
  func.func @transform_2(%arg0: i32, %arg1: i32, %arg2: i32, %arg3: memref<10xi32, #tpu.memory_space<smem>>) -> (i32, i32, i32) {
    %c0_i32 = arith.constant 0 : i32
    %c0_i32_0 = arith.constant 0 : i32
    return %arg1, %c0_i32, %arg2 : i32, i32, i32
  }
  func.func @transform_3(%arg0: i32, %arg1: i32, %arg2: i32, %arg3: memref<10xi32, #tpu.memory_space<smem>>) -> (i32, i32, i32) {
    %c0_i32 = arith.constant 0 : i32
    %c0_i32_0 = arith.constant 0 : i32
    return %arg1, %c0_i32, %arg2 : i32, i32, i32
  }
  func.func @transform_4(%arg0: i32, %arg1: i32, %arg2: i32, %arg3: memref<10xi32, #tpu.memory_space<smem>>) -> (i32, i32, i32) {
    %c0_i32 = arith.constant 0 : i32
    %c0_i32_0 = arith.constant 0 : i32
    return %arg1, %arg2, %c0_i32 : i32, i32, i32
  }
  func.func @transform_5(%arg0: i32, %arg1: i32, %arg2: i32, %arg3: memref<10xi32, #tpu.memory_space<smem>>) -> (i32, i32) {
    %c0_i32 = arith.constant 0 : i32
    %c0_i32_0 = arith.constant 0 : i32
    return %arg0, %c0_i32 : i32, i32
  }
}

</mosaic_0001>

<llo_original>
// kernel: tpu_custom_call.1
$region0: #{tpu_custom_call.1}
  #allocation0 [shape = 'u32[]', space=smem, size = 0x4, offset = 0x4, fixed_abs, tag = 'smem constant byte address 0x4 - core index']
  #allocation1 [shape = 'u32[144,128]{1,0:T(1,128)}', space=vmem, size = 0x12000, scoped, tag = 'internal scratch']
  #allocation2 [shape = 'f32[8,128]{1,0:T(8,128)}', space=vmem, size = 0x1000, scoped, tag = 'scratch operand']
  #allocation3 [shape = 's32[1]{0}', space=sflag, size = 0x4, scoped, tag = 'scoped memory for tpu_custom_call.1']
  #allocation4 [shape = 'u8[512]{0}', space=smem, size = 0x200, scoped, tag = 'prefetched SMEM operand 0']
  %s0 = inlined_call_operand.vmem [shape: s32[10], index: 0, kind: input, shape index: {}]
  %s1 = inlined_call_operand.vmem [shape: f32[16,128], index: 1, kind: input, shape index: {}]
  %s2 = inlined_call_operand.vmem [shape: f32[16,5], index: 2, kind: input, shape index: {}]
  %s3 = inlined_call_operand.hbm [shape: f32[5,128,384], index: 3, kind: input, shape index: {}]
  %s4 = inlined_call_operand.hbm [shape: f32[5,128,384], index: 4, kind: input, shape index: {}]
  %s5 = inlined_call_operand.hbm [shape: f32[5,384,128], index: 5, kind: input, shape index: {}]
  %s6 = inlined_call_operand.hbm [shape: f32[16,128], index: 6, kind: output, shape index: {}]
  %s7 = sld [smem:[#allocation0]]
  $region77: #{tpu_custom_call.1} parent=0
    _
  %s9 = ssub.s32 1, %s7
  %s10 = scalar_select 0, %s9, %s7
  %s11 = sshll.u32 %s0, 4
  %s12 = int_to_ptr.vmem [resolvable:$true] %s11
  %14 = dma.vmem_to_smem %s12, 16, [#allocation4], [#allocation3]
  %15 = dma.done [#allocation3], 16
  %16 = sfence
  $region1: #{tpu_custom_call.1} parent=0
    #allocation5 [shape = 'u8[131072]{0}', space=vmem, size = 0x20000, scoped, tag = 'input window, operand 3']
    #allocation6 [shape = 's32[2]{0}', space=sflag, size = 0x8, scoped, tag = 'scoped memory for tpu_custom_call.1']
    #allocation7 [shape = 's32[2]{0}', space=sflag, size = 0x8, scoped, tag = 'scoped memory for tpu_custom_call.1']
    #allocation8 [shape = 'u8[131072]{0}', space=vmem, size = 0x20000, scoped, tag = 'input window, operand 4']
    #allocation9 [shape = 's32[2]{0}', space=sflag, size = 0x8, scoped, tag = 'scoped memory for tpu_custom_call.1']
    #allocation10 [shape = 'u8[131072]{0}', space=vmem, size = 0x20000, scoped, tag = 'input window, operand 5']
    #allocation11 [shape = 'u8[8192]{0}', space=vmem, size = 0x2000, scoped, tag = 'output window, operand 0']
    %17 = vsyncpa [#allocation6], 0
    %s18 = scalar_lea.sflag [#allocation6], 1
    %19 = vsyncpa %s18, 0
    %20 = vsyncpa [#allocation9], 0
    %s21 = scalar_lea.sflag [#allocation9], 1
    %22 = vsyncpa %s21, 0
    %23 = vsyncpa [#allocation7], 0
    %s24 = scalar_lea.sflag [#allocation7], 1
    %25 = vsyncpa %s24, 0
    loop: start=0, step=1, limit=32
    $region2: #{tpu_custom_call.1} parent=1 // loop_pre_header
      _
    $region3: #{tpu_custom_call.1} parent=1 // loop_header
      %s27 = sphi 0, %s31
      %p28 = scmp.ge.s32.totalorder %s27, 32
      %s34 = sphi 0, %s53
      %s35 = sphi 0, %s49
      %s36 = sphi 0, %s45
      %s37 = sphi 0, %s34
      %s38 = sphi 0, %s35
      %s39 = sphi 0, %s36
      %s40 = sphi 0, %s37
      %s41 = sphi 0, %s38
      %s42 = sphi 0, %s39
      %s56 = sphi 0, %s58
      %s59 = sphi 0, %s56
      %s60 = sphi 0, %s59
      %s76 = sphi 0, %s60
      %s82 = sphi 0, %s84
      %s85 = sphi 0, %s82
      %s86 = sphi 0, %s85
      %s102 = sphi 0, %s86
      %s110 = sphi 0, %s112
      %s113 = sphi 0, %s110
      %s114 = sphi 0, %s113
      %s130 = sphi 0, %s114
      %s138 = sphi 0, %s140
      %s141 = sphi 0, %s138
      %s142 = sphi 0, %s141
      %s158 = sphi 0, %s142
      %s166 = sphi 0, %s168
      %s169 = sphi 0, %s166
      %s170 = sphi 0, %s169
      %s186 = sphi 0, %s170
      %s192 = sphi 0, %s194
      %s195 = sphi 0, %s192
      %s196 = sphi 0, %s195
      %s212 = sphi 0, %s196
    $region4: #{tpu_custom_call.1} parent=1 // loop_header_branch
      %30 = sbr.rel (%p28) target = $region8
    $region5: #{tpu_custom_call.1} parent=1 // loop_body
      %s32 = ssub.s32 %s27, 1
      %s33 = ssub.s32 %s27, 2
      %s43 = sadd.s32 1, %s36
      %p44 = scmp.ge.s32.totalorder %s43, 3
      %s45 = scalar_select %p44, 0, %s43
      %s46 = sadd.s32 1, %s35
      %s47 = scalar_select %p44, %s46, %s35
      %p48 = scmp.ge.s32.totalorder %s47, 5
      %s49 = scalar_select %p48, 0, %s47
      %s50 = sadd.s32 1, %s34
      %s51 = scalar_select %p48, %s50, %s34
      %p52 = scmp.ge.s32.totalorder %s51, 2
      %s53 = scalar_select %p52, 0, %s51
      %s54 = ssub.s32 %s34, %s53
      %p55 = scmp.eq.s32.totalorder %s54, 0
      %s57 = sadd.s32 %s56, 1
      %s58 = scalar_select %p55, %s56, %s57
      %p61 = pneg %p55
      %p62 = scmp.eq.s32.totalorder %s27, 29
      %p63 = por %p61, %p62
      %p64 = scmp.ne.s32.totalorder %s56, %s59
      %p65 = scmp.eq.s32.totalorder %s27, 0
      %p66 = por %p64, %p65
      %p67 = scmp.ne.s32.totalorder %s56, %s59
      %p68 = scmp.eq.s32.totalorder %s32, 29
      %p69 = por %p67, %p68
      %p70 = scmp.ne.s32.totalorder %s59, %s60
      %p71 = scmp.eq.s32.totalorder %s32, 0
      %p72 = por %p70, %p71
      %p73 = scmp.ne.s32.totalorder %s59, %s60
      %p74 = scmp.eq.s32.totalorder %s33, 29
      %p75 = por %p73, %p74
      %p77 = scmp.ne.s32.totalorder %s60, %s76
      %p78 = scmp.eq.s32.totalorder %s33, 0
      %p79 = por %p77, %p78
      %s80 = ssub.s32 %s34, %s53
      %p81 = scmp.eq.s32.totalorder %s80, 0
      %s83 = sadd.s32 %s82, 1
      %s84 = scalar_select %p81, %s82, %s83
      %p87 = pneg %p81
      %p88 = scmp.eq.s32.totalorder %s27, 29
      %p89 = por %p87, %p88
      %p90 = scmp.ne.s32.totalorder %s82, %s85
      %p91 = scmp.eq.s32.totalorder %s27, 0
      %p92 = por %p90, %p91
      %p93 = scmp.ne.s32.totalorder %s82, %s85
      %p94 = scmp.eq.s32.totalorder %s32, 29
      %p95 = por %p93, %p94
      %p96 = scmp.ne.s32.totalorder %s85, %s86
      %p97 = scmp.eq.s32.totalorder %s32, 0
      %p98 = por %p96, %p97
      %p99 = scmp.ne.s32.totalorder %s85, %s86
      %p100 = scmp.eq.s32.totalorder %s33, 29
      %p101 = por %p99, %p100
      %p103 = scmp.ne.s32.totalorder %s86, %s102
      %p104 = scmp.eq.s32.totalorder %s33, 0
      %p105 = por %p103, %p104
      %s106 = ssub.s32 %s35, %s49
      %s107 = ssub.s32 %s36, %s45
      %s108 = sor.u32 %s106, %s107
      %p109 = scmp.eq.s32.totalorder %s108, 0
      %s111 = sadd.s32 %s110, 1
      %s112 = scalar_select %p109, %s110, %s111
      %p115 = pneg %p109
      %p116 = scmp.eq.s32.totalorder %s27, 29
      %p117 = por %p115, %p116
      %p118 = scmp.ne.s32.totalorder %s110, %s113
      %p119 = scmp.eq.s32.totalorder %s27, 0
      %p120 = por %p118, %p119
      %p121 = scmp.ne.s32.totalorder %s110, %s113
      %p122 = scmp.eq.s32.totalorder %s32, 29
      %p123 = por %p121, %p122
      %p124 = scmp.ne.s32.totalorder %s113, %s114
      %p125 = scmp.eq.s32.totalorder %s32, 0
      %p126 = por %p124, %p125
      %p127 = scmp.ne.s32.totalorder %s113, %s114
      %p128 = scmp.eq.s32.totalorder %s33, 29
      %p129 = por %p127, %p128
      %p131 = scmp.ne.s32.totalorder %s114, %s130
      %p132 = scmp.eq.s32.totalorder %s33, 0
      %p133 = por %p131, %p132
      %s134 = ssub.s32 %s35, %s49
      %s135 = ssub.s32 %s36, %s45
      %s136 = sor.u32 %s134, %s135
      %p137 = scmp.eq.s32.totalorder %s136, 0
      %s139 = sadd.s32 %s138, 1
      %s140 = scalar_select %p137, %s138, %s139
      %p143 = pneg %p137
      %p144 = scmp.eq.s32.totalorder %s27, 29
      %p145 = por %p143, %p144
      %p146 = scmp.ne.s32.totalorder %s138, %s141
      %p147 = scmp.eq.s32.totalorder %s27, 0
      %p148 = por %p146, %p147
      %p149 = scmp.ne.s32.totalorder %s138, %s141
      %p150 = scmp.eq.s32.totalorder %s32, 29
      %p151 = por %p149, %p150
      %p152 = scmp.ne.s32.totalorder %s141, %s142
      %p153 = scmp.eq.s32.totalorder %s32, 0
      %p154 = por %p152, %p153
      %p155 = scmp.ne.s32.totalorder %s141, %s142
      %p156 = scmp.eq.s32.totalorder %s33, 29
      %p157 = por %p155, %p156
      %p159 = scmp.ne.s32.totalorder %s142, %s158
      %p160 = scmp.eq.s32.totalorder %s33, 0
      %p161 = por %p159, %p160
      %s162 = ssub.s32 %s35, %s49
      %s163 = ssub.s32 %s36, %s45
      %s164 = sor.u32 %s162, %s163
      %p165 = scmp.eq.s32.totalorder %s164, 0
      %s167 = sadd.s32 %s166, 1
      %s168 = scalar_select %p165, %s166, %s167
      %p171 = pneg %p165
      %p172 = scmp.eq.s32.totalorder %s27, 29
      %p173 = por %p171, %p172
      %p174 = scmp.ne.s32.totalorder %s166, %s169
      %p175 = scmp.eq.s32.totalorder %s27, 0
      %p176 = por %p174, %p175
      %p177 = scmp.ne.s32.totalorder %s166, %s169
      %p178 = scmp.eq.s32.totalorder %s32, 29
      %p179 = por %p177, %p178
      %p180 = scmp.ne.s32.totalorder %s169, %s170
      %p181 = scmp.eq.s32.totalorder %s32, 0
      %p182 = por %p180, %p181
      %p183 = scmp.ne.s32.totalorder %s169, %s170
      %p184 = scmp.eq.s32.totalorder %s33, 29
      %p185 = por %p183, %p184
      %p187 = scmp.ne.s32.totalorder %s170, %s186
      %p188 = scmp.eq.s32.totalorder %s33, 0
      %p189 = por %p187, %p188
      %s190 = ssub.s32 %s34, %s53
      %p191 = scmp.eq.s32.totalorder %s190, 0
      %s193 = sadd.s32 %s192, 1
      %s194 = scalar_select %p191, %s192, %s193
      %p197 = pneg %p191
      %p198 = scmp.eq.s32.totalorder %s27, 29
      %p199 = por %p197, %p198
      %p200 = scmp.ne.s32.totalorder %s192, %s195
      %p201 = scmp.eq.s32.totalorder %s27, 0
      %p202 = por %p200, %p201
      %p203 = scmp.ne.s32.totalorder %s192, %s195
      %p204 = scmp.eq.s32.totalorder %s32, 29
      %p205 = por %p203, %p204
      %p206 = scmp.ne.s32.totalorder %s195, %s196
      %p207 = scmp.eq.s32.totalorder %s32, 0
      %p208 = por %p206, %p207
      %p209 = scmp.ne.s32.totalorder %s195, %s196
      %p210 = scmp.eq.s32.totalorder %s33, 29
      %p211 = por %p209, %p210
      %p213 = scmp.ne.s32.totalorder %s196, %s212
      %p214 = scmp.eq.s32.totalorder %s33, 0
      %p215 = por %p213, %p214
      %p216 = scmp.le.s32.totalorder 1, %s27
      %p217 = scmp.lt.s32.totalorder %s27, 31
      %p218 = pnand %p216, %p217
      %p219 = pneg %p218
      // Predicated region
      $region9: #{tpu_custom_call.1} parent=5 // pred_check
        _
      $region10: #{tpu_custom_call.1} parent=5 // pred_check_branch
        %221 = sbr.rel (%p218) target = $region12
      $region11: #{tpu_custom_call.1} parent=5 // pred_region
        %s222 = ssub.s32 %s27, 1
      $region12: #{tpu_custom_call.1} parent=5 // pred_fallthru
        _
      %p223 = scmp.lt.s32.totalorder %s27, 30
      // Predicated region
      $region13: #{tpu_custom_call.1} parent=5 // pred_check
        %p224 = pneg %p223
      $region14: #{tpu_custom_call.1} parent=5 // pred_check_branch
        %226 = sbr.rel (%p224) target = $region16
      $region15: #{tpu_custom_call.1} parent=5 // pred_region
        // Predicated region
        $region17: #{tpu_custom_call.1} parent=15 // pred_check
          %p227 = pneg %p66
        $region18: #{tpu_custom_call.1} parent=15 // pred_check_branch
          %229 = sbr.rel (%p227) target = $region20
        $region19: #{tpu_custom_call.1} parent=15 // pred_region
          %p230 = scmp.lt.s32.totalorder %s34, 1
          %s231 = scalar_select %p230, %s34, 1
          %s232 = smul.addr %s231, 8
          %s233 = scalar_lea.vmem %s1, %s232
        $region20: #{tpu_custom_call.1} parent=15 // pred_fallthru
          _
        // Predicated region
        $region21: #{tpu_custom_call.1} parent=15 // pred_check
          %p234 = pneg %p92
        $region22: #{tpu_custom_call.1} parent=15 // pred_check_branch
          %236 = sbr.rel (%p234) target = $region24
        $region23: #{tpu_custom_call.1} parent=15 // pred_region
          %p237 = scmp.lt.s32.totalorder %s34, 1
          %s238 = scalar_select %p237, %s34, 1
          %s239 = smul.addr %s238, 8
          %s240 = scalar_lea.vmem %s2, %s239
        $region24: #{tpu_custom_call.1} parent=15 // pred_fallthru
          _
        // Predicated region
        $region25: #{tpu_custom_call.1} parent=15 // pred_check
          %p241 = pneg %p120
        $region26: #{tpu_custom_call.1} parent=15 // pred_check_branch
          %243 = sbr.rel (%p241) target = $region28
        $region27: #{tpu_custom_call.1} parent=15 // pred_region
          %s244 = sand.u32 %s110, 1
          %s245 = scalar_lea.sflag [#allocation6], %s244
          %s246 = sand.u32 %s110, 1
          %s247 = smul.addr %s246, 128
          %s248 = scalar_lea.vmem [#allocation5], %s247
          %s250 = ssub.s32 2048, 2048
          %251 = vsyncadd %s245, %s250
          %s252 = smul.addr %s35, 48
          %s253 = sadd.s32 %s36, %s252
          %s254 = smul.addr %s253, 128
          %s255 = scalar_lea.hbm %s3, %s254
          %s256 = sshll.u32 %s248, 4
          %s257 = int_to_ptr.vmem [resolvable:$true] %s256
          %262 = dma.hbm_to_vmem [thread:$0]  %s255, 2048, %s257, %s245, 384, 128, 8
        $region28: #{tpu_custom_call.1} parent=15 // pred_fallthru
          _
        // Predicated region
        $region29: #{tpu_custom_call.1} parent=15 // pred_check
          %p263 = pneg %p148
        $region30: #{tpu_custom_call.1} parent=15 // pred_check_branch
          %265 = sbr.rel (%p263) target = $region32
        $region31: #{tpu_custom_call.1} parent=15 // pred_region
          %s266 = sand.u32 %s27, 1
          %s267 = scalar_lea.sflag [#allocation9], %s266
          %s268 = sand.u32 %s138, 1
          %s269 = smul.addr %s268, 128
          %s270 = scalar_lea.vmem [#allocation8], %s269
          %s272 = ssub.s32 2048, 2048
          %273 = vsyncadd %s267, %s272
          %s274 = smul.addr %s35, 48
          %s275 = sadd.s32 %s36, %s274
          %s276 = smul.addr %s275, 128
          %s277 = scalar_lea.hbm %s4, %s276
          %s278 = sshll.u32 %s270, 4
          %s279 = int_to_ptr.vmem [resolvable:$true] %s278
          %284 = dma.hbm_to_vmem [thread:$0]  %s277, 2048, %s279, %s267, 384, 128, 8
        $region32: #{tpu_custom_call.1} parent=15 // pred_fallthru
          _
        // Predicated region
        $region33: #{tpu_custom_call.1} parent=15 // pred_check
          %p285 = pneg %p176
        $region34: #{tpu_custom_call.1} parent=15 // pred_check_branch
          %287 = sbr.rel (%p285) target = $region36
        $region35: #{tpu_custom_call.1} parent=15 // pred_region
          %s288 = sand.u32 %s27, 1
          %s289 = scalar_lea.sflag [#allocation9], %s288
          %s290 = sand.u32 %s166, 1
          %s291 = smul.addr %s290, 128
          %s292 = scalar_lea.vmem [#allocation10], %s291
          %s293 = smul.u32 16, %s36
          %s295 = ssub.s32 2048, 2048
          %296 = vsyncadd %s289, %s295
          %s297 = smul.addr %s35, 48
          %s298 = sadd.s32 %s293, %s297
          %s299 = smul.addr %s298, 128
          %s300 = scalar_lea.hbm %s5, %s299
          %s301 = sshll.u32 %s292, 4
          %s302 = int_to_ptr.vmem [resolvable:$true] %s301
          %307 = dma.hbm_to_vmem [thread:$0]  %s300, 2048, %s302, %s289, 128, 128, 8
        $region36: #{tpu_custom_call.1} parent=15 // pred_fallthru
          _
      $region16: #{tpu_custom_call.1} parent=5 // pred_fallthru
        _
      %p308 = scmp.le.s32.totalorder 1, %s27
      %p309 = scmp.lt.s32.totalorder %s27, 31
      %p310 = pnand %p308, %p309
      %p311 = pneg %p310
      // Predicated region
      $region37: #{tpu_custom_call.1} parent=5 // pred_check
        _
      $region38: #{tpu_custom_call.1} parent=5 // pred_check_branch
        %313 = sbr.rel (%p310) target = $region40
      $region39: #{tpu_custom_call.1} parent=5 // pred_region
        %s314 = ssub.s32 %s27, 1
        %s315 = sand.u32 %s113, 1
        %s316 = scalar_lea.sflag [#allocation6], %s315
        %s317 = sand.u32 %s113, 1
        %s318 = smul.addr %s317, 128
        %s319 = scalar_lea.vmem [#allocation5], %s318
        // Predicated region
        $region41: #{tpu_custom_call.1} parent=39 // pred_check
          %p320 = pneg %p126
        $region42: #{tpu_custom_call.1} parent=39 // pred_check_branch
          %322 = sbr.rel (%p320) target = $region44
        $region43: #{tpu_custom_call.1} parent=39 // pred_region
          %323 = dma.done %s316, 2048
        $region44: #{tpu_custom_call.1} parent=39 // pred_fallthru
          _
        %s324 = sand.u32 %s32, 1
        %s325 = scalar_lea.sflag [#allocation9], %s324
        %s326 = sand.u32 %s141, 1
        %s327 = smul.addr %s326, 128
        %s328 = scalar_lea.vmem [#allocation8], %s327
        // Predicated region
        $region45: #{tpu_custom_call.1} parent=39 // pred_check
          %p329 = pneg %p154
        $region46: #{tpu_custom_call.1} parent=39 // pred_check_branch
          %331 = sbr.rel (%p329) target = $region48
        $region47: #{tpu_custom_call.1} parent=39 // pred_region
          %332 = dma.done %s325, 2048
        $region48: #{tpu_custom_call.1} parent=39 // pred_fallthru
          _
        %s333 = sand.u32 %s32, 1
        %s334 = scalar_lea.sflag [#allocation9], %s333
        %s335 = sand.u32 %s169, 1
        %s336 = smul.addr %s335, 128
        %s337 = scalar_lea.vmem [#allocation10], %s336
        // Predicated region
        $region49: #{tpu_custom_call.1} parent=39 // pred_check
          %p338 = pneg %p182
        $region50: #{tpu_custom_call.1} parent=39 // pred_check_branch
          %340 = sbr.rel (%p338) target = $region52
        $region51: #{tpu_custom_call.1} parent=39 // pred_region
          %341 = dma.done %s334, 2048
        $region52: #{tpu_custom_call.1} parent=39 // pred_fallthru
          _
        %p342 = scmp.lt.s32.totalorder %s37, 1
        %s343 = scalar_select %p342, %s37, 1
        %s344 = smul.addr %s343, 8
        %s345 = scalar_lea.vmem %s1, %s344
        %p346 = pneg %p72
        %p347 = pneg %p69
        %p348 = scmp.lt.s32.totalorder %s37, 1
        %s349 = scalar_select %p348, %s37, 1
        %s350 = smul.addr %s349, 8
        %s351 = scalar_lea.vmem %s2, %s350
        %p352 = pneg %p98
        %p353 = pneg %p95
        %s354 = sand.u32 %s113, 1
        %s355 = scalar_lea.sflag [#allocation6], %s354
        %s356 = sand.u32 %s113, 1
        %s357 = smul.addr %s356, 128
        %s358 = scalar_lea.vmem [#allocation5], %s357
        %p359 = pneg %p126
        %p360 = pneg %p123
        %s361 = sand.u32 %s32, 1
        %s362 = scalar_lea.sflag [#allocation9], %s361
        %s363 = sand.u32 %s141, 1
        %s364 = smul.addr %s363, 128
        %s365 = scalar_lea.vmem [#allocation8], %s364
        %p366 = pneg %p154
        %p367 = pneg %p151
        %s368 = sand.u32 %s32, 1
        %s369 = scalar_lea.sflag [#allocation9], %s368
        %s370 = sand.u32 %s169, 1
        %s371 = smul.addr %s370, 128
        %s372 = scalar_lea.vmem [#allocation10], %s371
        %p373 = pneg %p182
        %p374 = pneg %p179
        %p375 = pneg %p208
        %p376 = pneg %p205
        %s377 = sand.u32 %s195, 1
        %s378 = scalar_lea.sflag [#allocation7], %s377
        %s379 = sand.u32 %s195, 1
        %s380 = smul.addr %s379, 8
        %s381 = scalar_lea.vmem [#allocation11], %s380
        %p382 = scmp.lt.s32.totalorder %s37, 1
        %s383 = scalar_select %p382, %s37, 1
        %s384 = smul.addr %s383, 8
        %s385 = scalar_lea.vmem %s1, %s384
        %p386 = scmp.lt.s32.totalorder %s37, 1
        %s387 = scalar_select %p386, %s37, 1
        %s388 = smul.addr %s387, 8
        %s389 = scalar_lea.vmem %s2, %s388
        %s390 = smul.u32 16, %s39
        %p391 = scmp.eq.s32.totalorder %s38, 0
        %p392 = scmp.eq.s32.totalorder %s39, 0
        %p393 = pnand %p391, %p392
        %p394 = pneg %p393
        // Predicated region
        $region53: #{tpu_custom_call.1} parent=39 // pred_check
          _
        $region54: #{tpu_custom_call.1} parent=39 // pred_check_branch
          %396 = sbr.rel (%p393) target = $region56
        $region55: #{tpu_custom_call.1} parent=39 // pred_region
          %397 = vst [vmem:[#allocation2] sm:$0xff] 0.0
        $region56: #{tpu_custom_call.1} parent=39 // pred_fallthru
          _
        %s398 = smul.u32 %s37, 5
        %s399 = sadd.s32 %s398, %s38
        %s400 = sld [smem:[#allocation4 + %s399]]
        %p401 = scmp.gt.s32.totalorder %s400, 0
        // Predicated region
        $region57: #{tpu_custom_call.1} parent=39 // pred_check
          %p402 = pneg %p401
        $region58: #{tpu_custom_call.1} parent=39 // pred_check_branch
          %404 = sbr.rel (%p402) target = $region60
        $region59: #{tpu_custom_call.1} parent=39 // pred_region
          %v405 = vld [vmem:[%s385] sm:$0xff]
          %v406 = vld [vmem:[%s319] sm:$0xff]
          %v407 = vld [vmem:[%s319 + $0x8] sm:$0xff]
          %v408 = vld [vmem:[%s319 + $0x10] sm:$0xff]
          %v409 = vld [vmem:[%s319 + $0x18] sm:$0xff]
          %v410 = vld [vmem:[%s319 + $0x20] sm:$0xff]
          %v411 = vld [vmem:[%s319 + $0x28] sm:$0xff]
          %v412 = vld [vmem:[%s319 + $0x30] sm:$0xff]
          %v413 = vld [vmem:[%s319 + $0x38] sm:$0xff]
          %v414 = vld [vmem:[%s319 + $0x40] sm:$0xff]
          %v415 = vld [vmem:[%s319 + $0x48] sm:$0xff]
          %v416 = vld [vmem:[%s319 + $0x50] sm:$0xff]
          %v417 = vld [vmem:[%s319 + $0x58] sm:$0xff]
          %v418 = vld [vmem:[%s319 + $0x60] sm:$0xff]
          %v419 = vld [vmem:[%s319 + $0x68] sm:$0xff]
          %v420 = vld [vmem:[%s319 + $0x70] sm:$0xff]
          %v421 = vld [vmem:[%s319 + $0x78] sm:$0xff]
          %v422 = vld [vmem:[%s328] sm:$0xff]
          %v423 = vld [vmem:[%s328 + $0x8] sm:$0xff]
          %v424 = vld [vmem:[%s328 + $0x10] sm:$0xff]
          %v425 = vld [vmem:[%s328 + $0x18] sm:$0xff]
          %v426 = vld [vmem:[%s328 + $0x20] sm:$0xff]
          %v427 = vld [vmem:[%s328 + $0x28] sm:$0xff]
          %v428 = vld [vmem:[%s328 + $0x30] sm:$0xff]
          %v429 = vld [vmem:[%s328 + $0x38] sm:$0xff]
          %v430 = vld [vmem:[%s328 + $0x40] sm:$0xff]
          %v431 = vld [vmem:[%s328 + $0x48] sm:$0xff]
          %v432 = vld [vmem:[%s328 + $0x50] sm:$0xff]
          %v433 = vld [vmem:[%s328 + $0x58] sm:$0xff]
          %v434 = vld [vmem:[%s328 + $0x60] sm:$0xff]
          %v435 = vld [vmem:[%s328 + $0x68] sm:$0xff]
          %v436 = vld [vmem:[%s328 + $0x70] sm:$0xff]
          %v437 = vld [vmem:[%s328 + $0x78] sm:$0xff]
          %v438 = vld [vmem:[%s337] sm:$0xff]
          %v439 = vld [vmem:[%s337 + $0x8] sm:$0xff]
          %v440 = vld [vmem:[%s337 + $0x10] sm:$0xff]
          %v441 = vld [vmem:[%s337 + $0x18] sm:$0xff]
          %v442 = vld [vmem:[%s337 + $0x20] sm:$0xff]
          %v443 = vld [vmem:[%s337 + $0x28] sm:$0xff]
          %v444 = vld [vmem:[%s337 + $0x30] sm:$0xff]
          %v445 = vld [vmem:[%s337 + $0x38] sm:$0xff]
          %v446 = vld [vmem:[%s337 + $0x40] sm:$0xff]
          %v447 = vld [vmem:[%s337 + $0x48] sm:$0xff]
          %v448 = vld [vmem:[%s337 + $0x50] sm:$0xff]
          %v449 = vld [vmem:[%s337 + $0x58] sm:$0xff]
          %v450 = vld [vmem:[%s337 + $0x60] sm:$0xff]
          %v451 = vld [vmem:[%s337 + $0x68] sm:$0xff]
          %v452 = vld [vmem:[%s337 + $0x70] sm:$0xff]
          %v453 = vld [vmem:[%s337 + $0x78] sm:$0xff]
          %454 = vmatprep.subr.mxu0 0.0
          %455 = vmatpush1.msra.mxu0 %v421
          %456 = vmatprep.subr.mxu0 0.0
          %457 = vmatpush1.msra.mxu0 %v420
          %458 = vmatprep.subr.mxu0 0.0
          %459 = vmatpush1.msra.mxu0 %v419
          %460 = vmatprep.subr.mxu0 0.0
          %461 = vmatpush1.msra.mxu0 %v418
          %462 = vmatprep.subr.mxu0 0.0
          %463 = vmatpush1.msra.mxu0 %v417
          %464 = vmatprep.subr.mxu0 0.0
          %465 = vmatpush1.msra.mxu0 %v416
          %466 = vmatprep.subr.mxu0 0.0
          %467 = vmatpush1.msra.mxu0 %v415
          %468 = vmatprep.subr.mxu0 0.0
          %469 = vmatpush1.msra.mxu0 %v414
          %470 = vmatprep.subr.mxu0 0.0
          %471 = vmatpush1.msra.mxu0 %v413
          %472 = vmatprep.subr.mxu0 0.0
          %473 = vmatpush1.msra.mxu0 %v412
          %474 = vmatprep.subr.mxu0 0.0
          %475 = vmatpush1.msra.mxu0 %v411
          %476 = vmatprep.subr.mxu0 0.0
          %477 = vmatpush1.msra.mxu0 %v410
          %478 = vmatprep.subr.mxu0 0.0
          %479 = vmatpush1.msra.mxu0 %v409
          %480 = vmatprep.subr.mxu0 0.0
          %481 = vmatpush1.msra.mxu0 %v408
          %482 = vmatprep.subr.mxu0 0.0
          %483 = vmatpush1.msra.mxu0 %v407
          %484 = vmatprep.subr.mxu0 0.0
          %485 = vmatpush1.msra.mxu0 %v406
          %486 = vmatprep.subr.mxu0 0.0
          %487 = vmatpush2.msra.mxu0 0.0
          %488 = vmatprep.subr.mxu0 0.0
          %489 = vmatpush2.msra.mxu0 0.0
          %490 = vmatprep.subr.mxu0 0.0
          %491 = vmatpush2.msra.mxu0 0.0
          %492 = vmatprep.subr.mxu0 0.0
          %493 = vmatpush2.msra.mxu0 0.0
          %494 = vmatprep.subr.mxu0 0.0
          %495 = vmatpush2.msra.mxu0 0.0
          %496 = vmatprep.subr.mxu0 0.0
          %497 = vmatpush2.msra.mxu0 0.0
          %498 = vmatprep.subr.mxu0 0.0
          %499 = vmatpush2.msra.mxu0 0.0
          %500 = vmatprep.subr.mxu0 0.0
          %501 = vmatpush2.msra.mxu0 0.0
          %502 = vmatprep.subr.mxu0 0.0
          %503 = vmatpush2.msra.mxu0 0.0
          %504 = vmatprep.subr.mxu0 0.0
          %505 = vmatpush2.msra.mxu0 0.0
          %506 = vmatprep.subr.mxu0 0.0
          %507 = vmatpush2.msra.mxu0 0.0
          %508 = vmatprep.subr.mxu0 0.0
          %509 = vmatpush2.msra.mxu0 0.0
          %510 = vmatprep.subr.mxu0 0.0
          %511 = vmatpush2.msra.mxu0 0.0
          %512 = vmatprep.subr.mxu0 0.0
          %513 = vmatpush2.msra.mxu0 0.0
          %514 = vmatprep.subr.mxu0 0.0
          %515 = vmatpush2.msra.mxu0 0.0
          %516 = vmatprep.subr.mxu0 0.0
          %517 = vmatpush2.msra.mxu0 0.0
          %518 = vmatprep.mubr.f32.mxu0 0.0
          %519 = vmatmul.mubr.f32.gmra.mxu0 %v405
          %v520 = vpop.f32.mrf.mxu0
          %v521 = vadd.f32 0.0, %v520
          %v522 = vpop.f32.mrf.mxu0
          %523 = vdwg.mxu0
          %524 = vmatprep.subr.mxu0 0.0
          %525 = vmatpush1.msra.mxu0 %v437
          %526 = vmatprep.subr.mxu0 0.0
          %527 = vmatpush1.msra.mxu0 %v436
          %528 = vmatprep.subr.mxu0 0.0
          %529 = vmatpush1.msra.mxu0 %v435
          %530 = vmatprep.subr.mxu0 0.0
          %531 = vmatpush1.msra.mxu0 %v434
          %532 = vmatprep.subr.mxu0 0.0
          %533 = vmatpush1.msra.mxu0 %v433
          %534 = vmatprep.subr.mxu0 0.0
          %535 = vmatpush1.msra.mxu0 %v432
          %536 = vmatprep.subr.mxu0 0.0
          %537 = vmatpush1.msra.mxu0 %v431
          %538 = vmatprep.subr.mxu0 0.0
          %539 = vmatpush1.msra.mxu0 %v430
          %540 = vmatprep.subr.mxu0 0.0
          %541 = vmatpush1.msra.mxu0 %v429
          %542 = vmatprep.subr.mxu0 0.0
          %543 = vmatpush1.msra.mxu0 %v428
          %544 = vmatprep.subr.mxu0 0.0
          %545 = vmatpush1.msra.mxu0 %v427
          %546 = vmatprep.subr.mxu0 0.0
          %547 = vmatpush1.msra.mxu0 %v426
          %548 = vmatprep.subr.mxu0 0.0
          %549 = vmatpush1.msra.mxu0 %v425
          %550 = vmatprep.subr.mxu0 0.0
          %551 = vmatpush1.msra.mxu0 %v424
          %552 = vmatprep.subr.mxu0 0.0
          %553 = vmatpush1.msra.mxu0 %v423
          %554 = vmatprep.subr.mxu0 0.0
          %555 = vmatpush1.msra.mxu0 %v422
          %556 = vmatprep.subr.mxu0 0.0
          %557 = vmatpush2.msra.mxu0 0.0
          %558 = vmatprep.subr.mxu0 0.0
          %559 = vmatpush2.msra.mxu0 0.0
          %560 = vmatprep.subr.mxu0 0.0
          %561 = vmatpush2.msra.mxu0 0.0
          %562 = vmatprep.subr.mxu0 0.0
          %563 = vmatpush2.msra.mxu0 0.0
          %564 = vmatprep.subr.mxu0 0.0
          %565 = vmatpush2.msra.mxu0 0.0
          %566 = vmatprep.subr.mxu0 0.0
          %567 = vmatpush2.msra.mxu0 0.0
          %568 = vmatprep.subr.mxu0 0.0
          %569 = vmatpush2.msra.mxu0 0.0
          %570 = vmatprep.subr.mxu0 0.0
          %571 = vmatpush2.msra.mxu0 0.0
          %572 = vmatprep.subr.mxu0 0.0
          %573 = vmatpush2.msra.mxu0 0.0
          %574 = vmatprep.subr.mxu0 0.0
          %575 = vmatpush2.msra.mxu0 0.0
          %576 = vmatprep.subr.mxu0 0.0
          %577 = vmatpush2.msra.mxu0 0.0
          %578 = vmatprep.subr.mxu0 0.0
          %579 = vmatpush2.msra.mxu0 0.0
          %580 = vmatprep.subr.mxu0 0.0
          %581 = vmatpush2.msra.mxu0 0.0
          %582 = vmatprep.subr.mxu0 0.0
          %583 = vmatpush2.msra.mxu0 0.0
          %584 = vmatprep.subr.mxu0 0.0
          %585 = vmatpush2.msra.mxu0 0.0
          %586 = vmatprep.subr.mxu0 0.0
          %587 = vmatpush2.msra.mxu0 0.0
          %588 = vmatprep.mubr.f32.mxu0 0.0
          %589 = vmatmul.mubr.f32.gmra.mxu0 %v405
          %v590 = vpop.f32.mrf.mxu0
          %v591 = vadd.f32 0.0, %v590
          %v592 = vpop.f32.mrf.mxu0
          %593 = vdwg.mxu0
          %v594 = vsub.f32 0.0, %v521
          %v595 = vmul.f32 %v594, 1.442695
          %v596 = vpow.pop %v595
          %v597 = vadd.f32 %v596, 1.0
          %v598 = vrcp.pop %v597
          %v599 = vmul.f32 %v521, %v598
          %v600 = vmul.f32 %v599, %v591
          %601 = vmatprep.subr.mxu0 0.0
          %602 = vmatpush1.msra.mxu0 %v453
          %603 = vmatprep.subr.mxu0 0.0
          %604 = vmatpush1.msra.mxu0 %v452
          %605 = vmatprep.subr.mxu0 0.0
          %606 = vmatpush1.msra.mxu0 %v451
          %607 = vmatprep.subr.mxu0 0.0
          %608 = vmatpush1.msra.mxu0 %v450
          %609 = vmatprep.subr.mxu0 0.0
          %610 = vmatpush1.msra.mxu0 %v449
          %611 = vmatprep.subr.mxu0 0.0
          %612 = vmatpush1.msra.mxu0 %v448
          %613 = vmatprep.subr.mxu0 0.0
          %614 = vmatpush1.msra.mxu0 %v447
          %615 = vmatprep.subr.mxu0 0.0
          %616 = vmatpush1.msra.mxu0 %v446
          %617 = vmatprep.subr.mxu0 0.0
          %618 = vmatpush1.msra.mxu0 %v445
          %619 = vmatprep.subr.mxu0 0.0
          %620 = vmatpush1.msra.mxu0 %v444
          %621 = vmatprep.subr.mxu0 0.0
          %622 = vmatpush1.msra.mxu0 %v443
          %623 = vmatprep.subr.mxu0 0.0
          %624 = vmatpush1.msra.mxu0 %v442
          %625 = vmatprep.subr.mxu0 0.0
          %626 = vmatpush1.msra.mxu0 %v441
          %627 = vmatprep.subr.mxu0 0.0
          %628 = vmatpush1.msra.mxu0 %v440
          %629 = vmatprep.subr.mxu0 0.0
          %630 = vmatpush1.msra.mxu0 %v439
          %631 = vmatprep.subr.mxu0 0.0
          %632 = vmatpush1.msra.mxu0 %v438
          %633 = vmatprep.subr.mxu0 0.0
          %634 = vmatpush2.msra.mxu0 0.0
          %635 = vmatprep.subr.mxu0 0.0
          %636 = vmatpush2.msra.mxu0 0.0
          %637 = vmatprep.subr.mxu0 0.0
          %638 = vmatpush2.msra.mxu0 0.0
          %639 = vmatprep.subr.mxu0 0.0
          %640 = vmatpush2.msra.mxu0 0.0
          %641 = vmatprep.subr.mxu0 0.0
          %642 = vmatpush2.msra.mxu0 0.0
          %643 = vmatprep.subr.mxu0 0.0
          %644 = vmatpush2.msra.mxu0 0.0
          %645 = vmatprep.subr.mxu0 0.0
          %646 = vmatpush2.msra.mxu0 0.0
          %647 = vmatprep.subr.mxu0 0.0
          %648 = vmatpush2.msra.mxu0 0.0
          %649 = vmatprep.subr.mxu0 0.0
          %650 = vmatpush2.msra.mxu0 0.0
          %651 = vmatprep.subr.mxu0 0.0
          %652 = vmatpush2.msra.mxu0 0.0
          %653 = vmatprep.subr.mxu0 0.0
          %654 = vmatpush2.msra.mxu0 0.0
          %655 = vmatprep.subr.mxu0 0.0
          %656 = vmatpush2.msra.mxu0 0.0
          %657 = vmatprep.subr.mxu0 0.0
          %658 = vmatpush2.msra.mxu0 0.0
          %659 = vmatprep.subr.mxu0 0.0
          %660 = vmatpush2.msra.mxu0 0.0
          %661 = vmatprep.subr.mxu0 0.0
          %662 = vmatpush2.msra.mxu0 0.0
          %663 = vmatprep.subr.mxu0 0.0
          %664 = vmatpush2.msra.mxu0 0.0
          %665 = vmatprep.mubr.f32.mxu0 0.0
          %666 = vmatmul.mubr.f32.gmra.mxu0 %v600
          %v667 = vpop.f32.mrf.mxu0
          %v668 = vadd.f32 0.0, %v667
          %v669 = vpop.f32.mrf.mxu0
          %670 = vdwg.mxu0
          %v671 = vld [vmem:[%s389] sm:$0xff]
          %v672 = vlaneseq
          %v673 = vand.u32 %v672, 127
          %v674 = vstv %s38
          %vm675 = vcmp.eq.s32.totalorder %v673, %v674
          %v676 = vsel %vm675, %v671, 0.0
          %vm677 = vcmask 39936
          %v678 = vsel %vm677, %v676, 0.0
          %679 = vadd.xlane.f32.xlu0 %v678
          %v680 = vpop.xlane.xlu0 %679
          %v681 = vld [vmem:[#allocation2] sm:$0xff]
          %v682 = vmul.f32 %v680, %v668
          %v683 = vadd.f32 %v681, %v682
          %684 = vst [vmem:[#allocation2] sm:$0xff] %v683
        $region60: #{tpu_custom_call.1} parent=39 // pred_fallthru
          _
        %p685 = scmp.eq.s32.totalorder %s38, 4
        %p686 = scmp.eq.s32.totalorder %s39, 2
        %p687 = pnand %p685, %p686
        %p688 = pneg %p687
        // Predicated region
        $region61: #{tpu_custom_call.1} parent=39 // pred_check
          _
        $region62: #{tpu_custom_call.1} parent=39 // pred_check_branch
          %690 = sbr.rel (%p687) target = $region64
        $region63: #{tpu_custom_call.1} parent=39 // pred_region
          %v691 = vld [vmem:[#allocation2] sm:$0xff]
          %692 = vst [vmem:[%s381] sm:$0xff] %v691
        $region64: #{tpu_custom_call.1} parent=39 // pred_fallthru
          _
        %s693 = sand.u32 %s195, 1
        %s694 = scalar_lea.sflag [#allocation7], %s693
        %s695 = sand.u32 %s195, 1
        %s696 = smul.addr %s695, 8
        %s697 = scalar_lea.vmem [#allocation11], %s696
        // Predicated region
        $region65: #{tpu_custom_call.1} parent=39 // pred_check
          %p698 = pneg %p205
        $region66: #{tpu_custom_call.1} parent=39 // pred_check_branch
          %700 = sbr.rel (%p698) target = $region68
        $region67: #{tpu_custom_call.1} parent=39 // pred_region
          %s702 = ssub.s32 128, 128
          %703 = vsyncadd %s694, %s702
          %s704 = smul.addr %s37, 128
          %s705 = scalar_lea.hbm %s6, %s704
          %s707 = sshll.u32 %s697, 4
          %s708 = int_to_ptr.vmem [resolvable:$true] %s707
          %710 = dma.vmem_to_hbm [thread:$0]  %s708, 128, %s705, %s694
        $region68: #{tpu_custom_call.1} parent=39 // pred_fallthru
          _
      $region40: #{tpu_custom_call.1} parent=5 // pred_fallthru
        _
      %p711 = scmp.le.s32.totalorder 2, %s27
      // Predicated region
      $region69: #{tpu_custom_call.1} parent=5 // pred_check
        %p712 = pneg %p711
      $region70: #{tpu_custom_call.1} parent=5 // pred_check_branch
        %714 = sbr.rel (%p712) target = $region72
      $region71: #{tpu_custom_call.1} parent=5 // pred_region
        %s715 = ssub.s32 %s27, 2
        // Predicated region
        $region73: #{tpu_custom_call.1} parent=71 // pred_check
          %p716 = pneg %p211
        $region74: #{tpu_custom_call.1} parent=71 // pred_check_branch
          %718 = sbr.rel (%p716) target = $region76
        $region75: #{tpu_custom_call.1} parent=71 // pred_region
          %s719 = sand.u32 %s196, 1
          %s720 = scalar_lea.sflag [#allocation7], %s719
          %s721 = sand.u32 %s196, 1
          %s722 = smul.addr %s721, 8
          %s723 = scalar_lea.vmem [#allocation11], %s722
          %724 = dma.done %s720, 128
        $region76: #{tpu_custom_call.1} parent=71 // pred_fallthru
          _
      $region72: #{tpu_custom_call.1} parent=5 // pred_fallthru
        _
    $region6: #{tpu_custom_call.1} parent=1 // loop_footer
      %s31 = sadd.s32 1, %s27
    $region7: #{tpu_custom_call.1} parent=1 // loop_footer_branch
      %26 = sbr.rel target = $region3
    $region8: #{tpu_custom_call.1} parent=1 // loop_exit
      _
    %725 = vsyncpa [#allocation6], 1
    %s726 = scalar_lea.sflag [#allocation6], 1
    %727 = vsyncpa %s726, 1
    %728 = vsyncpa [#allocation9], 1
    %s729 = scalar_lea.sflag [#allocation9], 1
    %730 = vsyncpa %s729, 1
    %731 = vsyncpa [#allocation7], 1
    %s732 = scalar_lea.sflag [#allocation7], 1
    %733 = vsyncpa %s732, 1

</llo_original>
